<compile_context>
chip_gen: v7x
topology: tpu7x:2x2x1
jax: 0.10.0
libtpu: 0.0.40
codegen_flags: <defaults>
</compile_context>

<pallas_src>
import functools

import jax
import jax.numpy as jnp
from jax.experimental import pallas as pl
from jax.experimental.pallas import tpu as pltpu

_LANE = 128
_SUBLANE = 8


def _round_up(n, m):
    return (n + m - 1) // m * m


@functools.cache
def _vmem_capacity_bytes():
    """Per-core VMEM capacity; conservative 64 MiB (v7x) fallback."""
    try:
        return int(pltpu.get_tpu_info().vmem_capacity_bytes)
    except Exception:
        return 64 << 20


@functools.cache
def _single_buffer_ok():
    """Probe once whether this jax/Mosaic build accepts pl.Buffered(1)
    (single-buffered resident blocks).  Fall back to default double
    buffering if the tiny probe kernel fails for any reason."""
    def _copy(x_ref, o_ref):
        o_ref[...] = x_ref[...]
    try:
        out = pl.pallas_call(
            _copy,
            out_shape=jax.ShapeDtypeStruct((8, 128), jnp.float32),
            grid=(1,),
            in_specs=[pl.BlockSpec((8, 128), lambda i: (0, 0),
                                   pipeline_mode=pl.Buffered(1))],
            out_specs=pl.BlockSpec((8, 128), lambda i: (0, 0)),
        )(jnp.zeros((8, 128), jnp.float32))
        jax.block_until_ready(out)
        return True
    except Exception:
        return False


def prepare_lstm_params(params, compute_dtype=jnp.bfloat16):
    """One-time parameter preparation (hoisted out of the per-step path).

    params: dict with 'w_ih' (4H, I), 'w_hh' (4H, H), 'b_ih' (4H,), 'b_hh' (4H,)
    Weights are stored gate-major as (4, K_pad, H_pad) in `compute_dtype`
    (use compute_dtype=jnp.float32 for bit-level parity with torch), the two
    biases are fused and kept in f32.
    """
    w_ih = jnp.asarray(params["w_ih"], jnp.float32)            # (4H, I)
    w_hh = jnp.asarray(params["w_hh"], jnp.float32)            # (4H, H)
    b = (jnp.asarray(params["b_ih"], jnp.float32)
         + jnp.asarray(params["b_hh"], jnp.float32))           # (4H,)

    four_h, in_dim = w_ih.shape
    hid = four_h // 4
    assert four_h == 4 * hid
    h_pad = _round_up(hid, _LANE)                              # lane-aligned gates
    i_pad = _round_up(in_dim, _LANE)

    def fuse(w, k, k_pad):
        # (4H, k) -> (4, k_pad, h_pad): gate-major, zero-padded K rows / H cols.
        w = w.reshape(4, hid, k).transpose(0, 2, 1)            # (4, k, hid)
        w = jnp.pad(w, ((0, 0), (0, k_pad - k), (0, h_pad - hid)))
        return w.astype(compute_dtype)

    w_x = fuse(w_ih, in_dim, i_pad)                            # (4, i_pad, h_pad)
    w_h = fuse(w_hh, hid, h_pad)                               # (4, h_pad, h_pad)
    bias = jnp.pad(b.reshape(4, 1, hid),
                   ((0, 0), (0, 0), (0, h_pad - hid))).astype(jnp.float32)

    return {
        "w_x": w_x, "w_h": w_h, "b": bias,
        "input_size": in_dim, "hidden_size": hid,
        "i_pad": i_pad, "h_pad": h_pad,
        "compute_dtype": compute_dtype,
    }


def _sigmoid(z):
    # sigmoid(z) == 0.5 * tanh(0.5 * z) + 0.5 : single EUP op per element.
    return 0.5 * jnp.tanh(0.5 * z) + 0.5


def _lstm_cell_kernel(x_ref, h_ref, c_ref, wx_ref, wh_ref, b_ref,
                      h_out_ref, c_out_ref):
    x = x_ref[...]
    h = h_ref[...]

    def gate(g):
        pre = jnp.dot(x, wx_ref[g], preferred_element_type=jnp.float32)
        pre = pre + jnp.dot(h, wh_ref[g], preferred_element_type=jnp.float32)
        return pre + b_ref[g]                                   # (Bb, th) + (1, th)

    i_g = _sigmoid(gate(0))
    f_g = _sigmoid(gate(1))
    g_g = jnp.tanh(gate(2))
    o_g = _sigmoid(gate(3))

    c_new = f_g * c_ref[...] + i_g * g_g                        # f32 cell state
    h_out_ref[...] = (o_g * jnp.tanh(c_new)).astype(h_out_ref.dtype)
    c_out_ref[...] = c_new


def _lstm_cell_kernel_zero_state(x_ref, wx_ref, b_ref, h_out_ref, c_out_ref):
    # state=None: c == 0 so f*c vanishes and the W_hh contraction is skipped.
    x = x_ref[...]

    def gate(g):
        return jnp.dot(x, wx_ref[g], preferred_element_type=jnp.float32) + b_ref[g]

    i_g = _sigmoid(gate(0))
    g_g = jnp.tanh(gate(2))
    o_g = _sigmoid(gate(3))

    c_new = i_g * g_g
    h_out_ref[...] = (o_g * jnp.tanh(c_new)).astype(h_out_ref.dtype)
    c_out_ref[...] = c_new


def _pad2d(a, rows, cols, dtype):
    a = a.astype(dtype)
    pr, pc = rows - a.shape[0], cols - a.shape[1]
    if pr or pc:
        a = jnp.pad(a, ((0, pr), (0, pc)))
    return a


def lstm_cell_wrapper_forward(x, prep, state=None):
    """Pallas equivalent of LSTMCellWrapper.forward (one LSTM step).

    x:     (B, I)
    prep:  output of prepare_lstm_params (pre-fused/padded weights & bias)
    state: optional (h, c), each (B, H); defaults to zeros (PyTorch default).
    Returns (h_new, c_new): h_new in x.dtype, c_new kept in f32.
    """
    assert x.ndim == 2
    batch, in_dim = x.shape
    hid = prep["hidden_size"]
    i_pad, h_pad = prep["i_pad"], prep["h_pad"]
    cdt = prep["compute_dtype"]
    assert in_dim == prep["input_size"]

    with_state = state is not None
    single_buf_ok = _single_buffer_ok()

    act_sz = jnp.dtype(cdt).itemsize
    out_sz = jnp.dtype(x.dtype).itemsize

    cap = _vmem_capacity_bytes()
    budget = (cap * 3) // 4

    def vmem_need(bb, th, wbuf):
        need = 2 * bb * i_pad * act_sz                     # x blocks (2 buffers)
        need += wbuf * 4 * i_pad * th * act_sz             # W_ih tile(s)
        need += wbuf * 4 * _SUBLANE * th * 4               # bias (sublane padded)
        if with_state:
            need += 2 * bb * h_pad * act_sz                # h blocks
            need += 2 * bb * th * 4                        # c in
            need += wbuf * 4 * h_pad * th * act_sz         # W_hh tile(s)
        need += 2 * bb * th * out_sz                       # h' out
        need += 2 * bb * th * 4                            # c' out
        return need

    # Hidden-tile candidates: multiples of 128 dividing h_pad, largest first.
    m = h_pad // _LANE
    h_tiles = [d * _LANE for d in range(m, 0, -1) if m % d == 0]

    # Batch block: sublane/packing aligned, capped at 512 rows (MXU-filling),
    # shrunk only if the VMEM working set would not fit.
    b_align = max(_SUBLANE, 32 // act_sz)
    block_b = min(_round_up(batch, b_align), 512)
    tile_h = _LANE
    while True:
        fitted = None
        for cand in h_tiles:
            wbuf = 1 if (cand == h_pad and single_buf_ok) else 2
            if vmem_need(block_b, cand, wbuf) <= budget:
                fitted = cand
                break
        if fitted is not None:
            tile_h = fitted
            break
        if block_b <= b_align:
            break
        block_b = max(b_align, block_b // 2)

    b_pad = _round_up(batch, block_b)
    grid_b = b_pad // block_b
    n_tiles = h_pad // tile_h

    # v7x-style chips (2 TensorCores, 64 MiB VMEM/core): make sure there are
    # at least two parallel grid steps so both cores get work at small batch.
    if (grid_b == 1 and n_tiles == 1 and cap <= (64 << 20)
            and (h_pad // _LANE) % 2 == 0):
        tile_h //= 2
        n_tiles = 2

    wbuf = 1 if (n_tiles == 1 and single_buf_ok) else 2
    need = vmem_need(block_b, tile_h, wbuf)
    vmem_limit = int(min(max(need + (4 << 20), 16 << 20), (cap * 95) // 100))

    # Weights / bias: single-buffer only when their index map is constant.
    w_mode = pl.Buffered(1) if (n_tiles == 1 and single_buf_ok) else None

    def wspec(shape, imap):
        if w_mode is None:
            return pl.BlockSpec(shape, imap)
        return pl.BlockSpec(shape, imap, pipeline_mode=w_mode)

    w_x, w_h, bias = prep["w_x"], prep["w_h"], prep["b"]
    x_p = _pad2d(x, b_pad, i_pad, cdt)

    out_shape = (jax.ShapeDtypeStruct((b_pad, h_pad), x.dtype),   # h'
                 jax.ShapeDtypeStruct((b_pad, h_pad), jnp.float32))  # c' (f32)
    out_specs = (pl.BlockSpec((block_b, tile_h), lambda n, b: (b, n)),
                 pl.BlockSpec((block_b, tile_h), lambda n, b: (b, n)))
    cparams = pltpu.CompilerParams(
        dimension_semantics=("parallel", "parallel"),
        vmem_limit_bytes=vmem_limit)

    if with_state:
        h0, c0 = state
        h_p = _pad2d(h0, b_pad, h_pad, cdt)
        c_p = _pad2d(c0, b_pad, h_pad, jnp.float32)
        h_out, c_out = pl.pallas_call(
            _lstm_cell_kernel,
            out_shape=out_shape,
            grid=(n_tiles, grid_b),          # batch innermost: weights stream once
            in_specs=[
                pl.BlockSpec((block_b, i_pad), lambda n, b: (b, 0)),
                pl.BlockSpec((block_b, h_pad), lambda n, b: (b, 0)),
                pl.BlockSpec((block_b, tile_h), lambda n, b: (b, n)),
                wspec((4, i_pad, tile_h), lambda n, b: (0, 0, n)),
                wspec((4, h_pad, tile_h), lambda n, b: (0, 0, n)),
                wspec((4, 1, tile_h), lambda n, b: (0, 0, n)),
            ],
            out_specs=out_specs,
            input_output_aliases={2: 1},     # c_in -> c_out, in-place cell update
            compiler_params=cparams,
        )(x_p, h_p, c_p, w_x, w_h, bias)
    else:
        # Default zero state: no h/c buffers, no W_hh matmul at all.
        h_out, c_out = pl.pallas_call(
            _lstm_cell_kernel_zero_state,
            out_shape=out_shape,
            grid=(n_tiles, grid_b),
            in_specs=[
                pl.BlockSpec((block_b, i_pad), lambda n, b: (b, 0)),
                wspec((4, i_pad, tile_h), lambda n, b: (0, 0, n)),
                wspec((4, 1, tile_h), lambda n, b: (0, 0, n)),
            ],
            out_specs=out_specs,
            compiler_params=cparams,
        )(x_p, w_x, bias)

    h_new = h_out[:batch, :hid]              # already x.dtype
    c_new = c_out[:batch, :hid]              # f32 cell state (not truncated)
    return h_new, c_new


def _reference_lstm_cell(x, params, state):
    """Pure-JAX f32 reference (mirrors torch.nn.LSTM single step)."""
    h, c = state
    gates = (x @ params["w_ih"].T + params["b_ih"]
             + h @ params["w_hh"].T + params["b_hh"])
    hid = h.shape[-1]
    i = jax.nn.sigmoid(gates[:, 0 * hid:1 * hid])
    f = jax.nn.sigmoid(gates[:, 1 * hid:2 * hid])
    g = jnp.tanh(gates[:, 2 * hid:3 * hid])
    o = jax.nn.sigmoid(gates[:, 3 * hid:4 * hid])
    c_new = f * c + i * g
    h_new = o * jnp.tanh(c_new)
    return h_new, c_new


if __name__ == "__main__":
    B, I, H = 8, 32, 32
    key = jax.random.PRNGKey(0)
    kx, kh, kc, k1, k2, k3, k4 = jax.random.split(key, 7)

    # Deterministic synthetic parameters (shapes match nn.LSTM(I, H, 1,
    # batch_first=True, bidirectional=False)).
    scale = 1.0 / jnp.sqrt(H)
    params = {
        "w_ih": jax.random.uniform(k1, (4 * H, I), jnp.float32, -scale, scale),
        "w_hh": jax.random.uniform(k2, (4 * H, H), jnp.float32, -scale, scale),
        "b_ih": jax.random.uniform(k3, (4 * H,), jnp.float32, -scale, scale),
        "b_hh": jax.random.uniform(k4, (4 * H,), jnp.float32, -scale, scale),
    }

    x = jax.random.normal(kx, (B, I), jnp.float32)
    h0 = jax.random.normal(kh, (B, H), jnp.float32)
    c0 = jax.random.normal(kc, (B, H), jnp.float32)

    # One-time parameter prep (split/transpose/pad/cast weights) — NOT per call.
    prep = prepare_lstm_params(params)

    fwd = jax.jit(functools.partial(lstm_cell_wrapper_forward, prep=prep))

    # With an explicit initial state.
    h1, c1 = fwd(x, state=(h0, c0))
    jax.block_until_ready((h1, c1))

    # With default (zero) initial state, as in forward(x) with state=None.
    h1z, c1z = fwd(x)
    jax.block_until_ready((h1z, c1z))

    # Sanity check against pure-JAX f32 reference (bf16 matmul -> looser tol).
    hr, cr = _reference_lstm_cell(x, params, (h0, c0))
    assert jnp.allclose(h1, hr, atol=5e-2), "h mismatch"
    assert jnp.allclose(c1, cr, atol=5e-2), "c mismatch"
    hrz, crz = _reference_lstm_cell(x, params,
                                    (jnp.zeros((B, H)), jnp.zeros((B, H))))
    assert jnp.allclose(h1z, hrz, atol=5e-2), "h (zero-state) mismatch"
    assert jnp.allclose(c1z, crz, atol=5e-2), "c (zero-state) mismatch"

    print("KERNEL_OK")
</pallas_src>

<mosaic_0001>
module attributes {stable_mosaic.version = 11 : i64} {
  func.func @_lstm_cell_kernel(%arg0: i32, %arg1: i32, %arg2: memref<16x128xbf16, #tpu.memory_space<vmem>>, %arg3: memref<16x128xbf16, #tpu.memory_space<vmem>>, %arg4: memref<16x128xf32, #tpu.memory_space<vmem>>, %arg5: memref<4x128x128xbf16, #tpu.memory_space<vmem>>, %arg6: memref<4x128x128xbf16, #tpu.memory_space<vmem>>, %arg7: memref<4x1x128xf32, #tpu.memory_space<vmem>>, %arg8: memref<16x128xf32, #tpu.memory_space<vmem>>, %arg9: memref<16x128xf32, #tpu.memory_space<vmem>>) attributes {dimension_semantics = [#tpu.dimension_semantics<parallel>, #tpu.dimension_semantics<parallel>], iteration_bounds = array<i64: 1, 1>, scalar_prefetch = 0 : i64, scratch_operands = 0 : i64, tpu.core_type = #tpu.core_type<tc>, window_params = [{transform_indices = @transform_0, window_bounds = array<i64: 16, 128>}, {transform_indices = @transform_1, window_bounds = array<i64: 16, 128>}, {transform_indices = @transform_2, window_bounds = array<i64: 16, 128>}, {pipeline_mode = #tpu.pipeline_mode<synchronous>, transform_indices = @transform_3, window_bounds = array<i64: 4, 128, 128>}, {pipeline_mode = #tpu.pipeline_mode<synchronous>, transform_indices = @transform_4, window_bounds = array<i64: 4, 128, 128>}, {pipeline_mode = #tpu.pipeline_mode<synchronous>, transform_indices = @transform_5, window_bounds = array<i64: 4, 1, 128>}, {transform_indices = @transform_6, window_bounds = array<i64: 16, 128>}, {transform_indices = @transform_7, window_bounds = array<i64: 16, 128>}]} {
    %c0 = arith.constant 0 : index
    %c0_0 = arith.constant 0 : index
    %0 = vector.load %arg2[%c0, %c0_0] : memref<16x128xbf16, #tpu.memory_space<vmem>>, vector<16x128xbf16>
    %c0_1 = arith.constant 0 : index
    %c0_2 = arith.constant 0 : index
    %1 = vector.load %arg3[%c0_1, %c0_2] : memref<16x128xbf16, #tpu.memory_space<vmem>>, vector<16x128xbf16>
    %c0_3 = arith.constant 0 : index
    %c0_4 = arith.constant 0 : index
    %c0_5 = arith.constant 0 : index
    %2 = vector.load %arg5[%c0_3, %c0_4, %c0_5] : memref<4x128x128xbf16, #tpu.memory_space<vmem>>, vector<1x128x128xbf16>
    %3 = vector.shape_cast %2 : vector<1x128x128xbf16> to vector<128x128xbf16>
    %cst = arith.constant dense<0.000000e+00> : vector<16x128xf32>
    %4 = tpu.matmul %0, %3, %cst {dimension_numbers = #tpu.dot_dimension_numbers<[1], [0], [0], [1], [0, 0, 1, 1], [], []>} : vector<16x128xbf16>, vector<128x128xbf16>, vector<16x128xf32> -> vector<16x128xf32>
    %c0_6 = arith.constant 0 : index
    %c0_7 = arith.constant 0 : index
    %c0_8 = arith.constant 0 : index
    %5 = vector.load %arg6[%c0_6, %c0_7, %c0_8] : memref<4x128x128xbf16, #tpu.memory_space<vmem>>, vector<1x128x128xbf16>
    %6 = vector.shape_cast %5 : vector<1x128x128xbf16> to vector<128x128xbf16>
    %cst_9 = arith.constant dense<0.000000e+00> : vector<16x128xf32>
    %7 = tpu.matmul %1, %6, %cst_9 {dimension_numbers = #tpu.dot_dimension_numbers<[1], [0], [0], [1], [0, 0, 1, 1], [], []>} : vector<16x128xbf16>, vector<128x128xbf16>, vector<16x128xf32> -> vector<16x128xf32>
    %8 = arith.addf %4, %7 : vector<16x128xf32>
    %c0_10 = arith.constant 0 : index
    %c0_11 = arith.constant 0 : index
    %c0_12 = arith.constant 0 : index
    %9 = vector.load %arg7[%c0_10, %c0_11, %c0_12] : memref<4x1x128xf32, #tpu.memory_space<vmem>>, vector<1x1x128xf32>
    %10 = vector.shape_cast %9 : vector<1x1x128xf32> to vector<1x128xf32>
    %11 = vector.broadcast %10 : vector<1x128xf32> to vector<16x128xf32>
    %12 = arith.addf %8, %11 : vector<16x128xf32>
    %cst_13 = arith.constant 5.000000e-01 : f32
    %13 = vector.broadcast %cst_13 : f32 to vector<16x128xf32>
    %14 = arith.mulf %13, %12 : vector<16x128xf32>
    %15 = math.tanh %14 : vector<16x128xf32>
    %cst_14 = arith.constant 5.000000e-01 : f32
    %16 = vector.broadcast %cst_14 : f32 to vector<16x128xf32>
    %17 = arith.mulf %16, %15 : vector<16x128xf32>
    %cst_15 = arith.constant 5.000000e-01 : f32
    %18 = vector.broadcast %cst_15 : f32 to vector<16x128xf32>
    %19 = arith.addf %17, %18 : vector<16x128xf32>
    %c1 = arith.constant 1 : index
    %c0_16 = arith.constant 0 : index
    %c0_17 = arith.constant 0 : index
    %20 = vector.load %arg5[%c1, %c0_16, %c0_17] : memref<4x128x128xbf16, #tpu.memory_space<vmem>>, vector<1x128x128xbf16>
    %21 = vector.shape_cast %20 : vector<1x128x128xbf16> to vector<128x128xbf16>
    %cst_18 = arith.constant dense<0.000000e+00> : vector<16x128xf32>
    %22 = tpu.matmul %0, %21, %cst_18 {dimension_numbers = #tpu.dot_dimension_numbers<[1], [0], [0], [1], [0, 0, 1, 1], [], []>} : vector<16x128xbf16>, vector<128x128xbf16>, vector<16x128xf32> -> vector<16x128xf32>
    %c1_19 = arith.constant 1 : index
    %c0_20 = arith.constant 0 : index
    %c0_21 = arith.constant 0 : index
    %23 = vector.load %arg6[%c1_19, %c0_20, %c0_21] : memref<4x128x128xbf16, #tpu.memory_space<vmem>>, vector<1x128x128xbf16>
    %24 = vector.shape_cast %23 : vector<1x128x128xbf16> to vector<128x128xbf16>
    %cst_22 = arith.constant dense<0.000000e+00> : vector<16x128xf32>
    %25 = tpu.matmul %1, %24, %cst_22 {dimension_numbers = #tpu.dot_dimension_numbers<[1], [0], [0], [1], [0, 0, 1, 1], [], []>} : vector<16x128xbf16>, vector<128x128xbf16>, vector<16x128xf32> -> vector<16x128xf32>
    %26 = arith.addf %22, %25 : vector<16x128xf32>
    %c1_23 = arith.constant 1 : index
    %c0_24 = arith.constant 0 : index
    %c0_25 = arith.constant 0 : index
    %27 = vector.load %arg7[%c1_23, %c0_24, %c0_25] : memref<4x1x128xf32, #tpu.memory_space<vmem>>, vector<1x1x128xf32>
    %28 = vector.shape_cast %27 : vector<1x1x128xf32> to vector<1x128xf32>
    %29 = vector.broadcast %28 : vector<1x128xf32> to vector<16x128xf32>
    %30 = arith.addf %26, %29 : vector<16x128xf32>
    %cst_26 = arith.constant 5.000000e-01 : f32
    %31 = vector.broadcast %cst_26 : f32 to vector<16x128xf32>
    %32 = arith.mulf %31, %30 : vector<16x128xf32>
    %33 = math.tanh %32 : vector<16x128xf32>
    %cst_27 = arith.constant 5.000000e-01 : f32
    %34 = vector.broadcast %cst_27 : f32 to vector<16x128xf32>
    %35 = arith.mulf %34, %33 : vector<16x128xf32>
    %cst_28 = arith.constant 5.000000e-01 : f32
    %36 = vector.broadcast %cst_28 : f32 to vector<16x128xf32>
    %37 = arith.addf %35, %36 : vector<16x128xf32>
    %c2 = arith.constant 2 : index
    %c0_29 = arith.constant 0 : index
    %c0_30 = arith.constant 0 : index
    %38 = vector.load %arg5[%c2, %c0_29, %c0_30] : memref<4x128x128xbf16, #tpu.memory_space<vmem>>, vector<1x128x128xbf16>
    %39 = vector.shape_cast %38 : vector<1x128x128xbf16> to vector<128x128xbf16>
    %cst_31 = arith.constant dense<0.000000e+00> : vector<16x128xf32>
    %40 = tpu.matmul %0, %39, %cst_31 {dimension_numbers = #tpu.dot_dimension_numbers<[1], [0], [0], [1], [0, 0, 1, 1], [], []>} : vector<16x128xbf16>, vector<128x128xbf16>, vector<16x128xf32> -> vector<16x128xf32>
    %c2_32 = arith.constant 2 : index
    %c0_33 = arith.constant 0 : index
    %c0_34 = arith.constant 0 : index
    %41 = vector.load %arg6[%c2_32, %c0_33, %c0_34] : memref<4x128x128xbf16, #tpu.memory_space<vmem>>, vector<1x128x128xbf16>
    %42 = vector.shape_cast %41 : vector<1x128x128xbf16> to vector<128x128xbf16>
    %cst_35 = arith.constant dense<0.000000e+00> : vector<16x128xf32>
    %43 = tpu.matmul %1, %42, %cst_35 {dimension_numbers = #tpu.dot_dimension_numbers<[1], [0], [0], [1], [0, 0, 1, 1], [], []>} : vector<16x128xbf16>, vector<128x128xbf16>, vector<16x128xf32> -> vector<16x128xf32>
    %44 = arith.addf %40, %43 : vector<16x128xf32>
    %c2_36 = arith.constant 2 : index
    %c0_37 = arith.constant 0 : index
    %c0_38 = arith.constant 0 : index
    %45 = vector.load %arg7[%c2_36, %c0_37, %c0_38] : memref<4x1x128xf32, #tpu.memory_space<vmem>>, vector<1x1x128xf32>
    %46 = vector.shape_cast %45 : vector<1x1x128xf32> to vector<1x128xf32>
    %47 = vector.broadcast %46 : vector<1x128xf32> to vector<16x128xf32>
    %48 = arith.addf %44, %47 : vector<16x128xf32>
    %49 = math.tanh %48 : vector<16x128xf32>
    %c3 = arith.constant 3 : index
    %c0_39 = arith.constant 0 : index
    %c0_40 = arith.constant 0 : index
    %50 = vector.load %arg5[%c3, %c0_39, %c0_40] : memref<4x128x128xbf16, #tpu.memory_space<vmem>>, vector<1x128x128xbf16>
    %51 = vector.shape_cast %50 : vector<1x128x128xbf16> to vector<128x128xbf16>
    %cst_41 = arith.constant dense<0.000000e+00> : vector<16x128xf32>
    %52 = tpu.matmul %0, %51, %cst_41 {dimension_numbers = #tpu.dot_dimension_numbers<[1], [0], [0], [1], [0, 0, 1, 1], [], []>} : vector<16x128xbf16>, vector<128x128xbf16>, vector<16x128xf32> -> vector<16x128xf32>
    %c3_42 = arith.constant 3 : index
    %c0_43 = arith.constant 0 : index
    %c0_44 = arith.constant 0 : index
    %53 = vector.load %arg6[%c3_42, %c0_43, %c0_44] : memref<4x128x128xbf16, #tpu.memory_space<vmem>>, vector<1x128x128xbf16>
    %54 = vector.shape_cast %53 : vector<1x128x128xbf16> to vector<128x128xbf16>
    %cst_45 = arith.constant dense<0.000000e+00> : vector<16x128xf32>
    %55 = tpu.matmul %1, %54, %cst_45 {dimension_numbers = #tpu.dot_dimension_numbers<[1], [0], [0], [1], [0, 0, 1, 1], [], []>} : vector<16x128xbf16>, vector<128x128xbf16>, vector<16x128xf32> -> vector<16x128xf32>
    %56 = arith.addf %52, %55 : vector<16x128xf32>
    %c3_46 = arith.constant 3 : index
    %c0_47 = arith.constant 0 : index
    %c0_48 = arith.constant 0 : index
    %57 = vector.load %arg7[%c3_46, %c0_47, %c0_48] : memref<4x1x128xf32, #tpu.memory_space<vmem>>, vector<1x1x128xf32>
    %58 = vector.shape_cast %57 : vector<1x1x128xf32> to vector<1x128xf32>
    %59 = vector.broadcast %58 : vector<1x128xf32> to vector<16x128xf32>
    %60 = arith.addf %56, %59 : vector<16x128xf32>
    %cst_49 = arith.constant 5.000000e-01 : f32
    %61 = vector.broadcast %cst_49 : f32 to vector<16x128xf32>
    %62 = arith.mulf %61, %60 : vector<16x128xf32>
    %63 = math.tanh %62 : vector<16x128xf32>
    %cst_50 = arith.constant 5.000000e-01 : f32
    %64 = vector.broadcast %cst_50 : f32 to vector<16x128xf32>
    %65 = arith.mulf %64, %63 : vector<16x128xf32>
    %cst_51 = arith.constant 5.000000e-01 : f32
    %66 = vector.broadcast %cst_51 : f32 to vector<16x128xf32>
    %67 = arith.addf %65, %66 : vector<16x128xf32>
    %c0_52 = arith.constant 0 : index
    %c0_53 = arith.constant 0 : index
    %68 = vector.load %arg4[%c0_52, %c0_53] : memref<16x128xf32, #tpu.memory_space<vmem>>, vector<16x128xf32>
    %69 = arith.mulf %37, %68 : vector<16x128xf32>
    %70 = arith.mulf %19, %49 : vector<16x128xf32>
    %71 = arith.addf %69, %70 : vector<16x128xf32>
    %72 = math.tanh %71 : vector<16x128xf32>
    %73 = arith.mulf %67, %72 : vector<16x128xf32>
    %c0_54 = arith.constant 0 : index
    %c0_55 = arith.constant 0 : index
    %74 = vector.load %arg8[%c0_54, %c0_55] : memref<16x128xf32, #tpu.memory_space<vmem>>, vector<16x128xf32>
    tpu.vector_store %arg8[%c0_54, %c0_55], %73 {strides = array<i32>} : memref<16x128xf32, #tpu.memory_space<vmem>>, vector<16x128xf32>,
    %c0_56 = arith.constant 0 : index
    %c0_57 = arith.constant 0 : index
    %75 = vector.load %arg9[%c0_56, %c0_57] : memref<16x128xf32, #tpu.memory_space<vmem>>, vector<16x128xf32>
    tpu.vector_store %arg9[%c0_56, %c0_57], %71 {strides = array<i32>} : memref<16x128xf32, #tpu.memory_space<vmem>>, vector<16x128xf32>,
    return
  }
  func.func @transform_0(%arg0: i32, %arg1: i32) -> (i32, i32) {
    %c0_i32 = arith.constant 0 : i32
    %c0_i32_0 = arith.constant 0 : i32
    return %arg1, %c0_i32 : i32, i32
  }
  func.func @transform_1(%arg0: i32, %arg1: i32) -> (i32, i32) {
    %c0_i32 = arith.constant 0 : i32
    %c0_i32_0 = arith.constant 0 : i32
    return %arg1, %c0_i32 : i32, i32
  }
  func.func @transform_2(%arg0: i32, %arg1: i32) -> (i32, i32) {
    %c0_i32 = arith.constant 0 : i32
    return %arg1, %arg0 : i32, i32
  }
  func.func @transform_3(%arg0: i32, %arg1: i32) -> (i32, i32, i32) {
    %c0_i32 = arith.constant 0 : i32
    %c0_i32_0 = arith.constant 0 : i32
    %c0_i32_1 = arith.constant 0 : i32
    return %c0_i32, %c0_i32_0, %arg0 : i32, i32, i32
  }
  func.func @transform_4(%arg0: i32, %arg1: i32) -> (i32, i32, i32) {
    %c0_i32 = arith.constant 0 : i32
    %c0_i32_0 = arith.constant 0 : i32
    %c0_i32_1 = arith.constant 0 : i32
    return %c0_i32, %c0_i32_0, %arg0 : i32, i32, i32
  }
  func.func @transform_5(%arg0: i32, %arg1: i32) -> (i32, i32, i32) {
    %c0_i32 = arith.constant 0 : i32
    %c0_i32_0 = arith.constant 0 : i32
    %c0_i32_1 = arith.constant 0 : i32
    return %c0_i32, %c0_i32_0, %arg0 : i32, i32, i32
  }
  func.func @transform_6(%arg0: i32, %arg1: i32) -> (i32, i32) {
    %c0_i32 = arith.constant 0 : i32
    return %arg1, %arg0 : i32, i32
  }
  func.func @transform_7(%arg0: i32, %arg1: i32) -> (i32, i32) {
    %c0_i32 = arith.constant 0 : i32
    return %arg1, %arg0 : i32, i32
  }
}

</mosaic_0001>

<llo_original>
// kernel: lstm_cell_wrapper_forward.1
$region0: #{lstm_cell_wrapper_forward.1}
  #allocation0 [shape = 'u32[]', space=smem, size = 0x4, offset = 0x4, fixed_abs, tag = 'smem constant byte address 0x4 - core index']
  #allocation1 [shape = 'u32[144,128]{1,0:T(1,128)}', space=vmem, size = 0x12000, scoped, tag = 'internal scratch']
  %s0 = inlined_call_operand.vmem [shape: bf16[16,128], index: 0, kind: input, shape index: {}]
  %s1 = inlined_call_operand.vmem [shape: bf16[16,128], index: 1, kind: input, shape index: {}]
  %s2 = inlined_call_operand.vmem [shape: f32[16,128], index: 2, kind: input, shape index: {}, may-alias: {2,7}]
  %s3 = inlined_call_operand.hbm [shape: bf16[4,128,128], index: 3, kind: input, shape index: {}]
  %s4 = inlined_call_operand.hbm [shape: bf16[4,128,128], index: 4, kind: input, shape index: {}]
  %s5 = inlined_call_operand.vmem [shape: f32[4,1,128], index: 5, kind: input, shape index: {}]
  %s6 = inlined_call_operand.vmem [shape: f32[16,128], index: 6, kind: output, shape index: {0}]
  %s7 = inlined_call_operand.vmem [shape: f32[16,128], index: 7, kind: output, shape index: {1}, may-alias: {2,7}]
  %8 = xla_tuple %s6, %s7
  %s9 = sld [smem:[#allocation0]]
  $region50: #{lstm_cell_wrapper_forward.1} parent=0
    _
  %s11 = ssub.s32 1, %s9
  %s12 = scalar_select 0, %s11, %s9
  $region1: #{lstm_cell_wrapper_forward.1} parent=0
    #allocation2 [shape = 'u8[131072]{0}', space=vmem, size = 0x20000, scoped, tag = 'input window, operand 3, single buffered']
    #allocation3 [shape = 's32[1]{0}', space=sflag, size = 0x4, scoped, tag = 'scoped memory for lstm_cell_wrapper_forward.1']
    #allocation4 [shape = 'u8[131072]{0}', space=vmem, size = 0x20000, scoped, tag = 'input window, operand 4, single buffered']
    #allocation5 [shape = 's32[1]{0}', space=sflag, size = 0x4, scoped, tag = 'scoped memory for lstm_cell_wrapper_forward.1']
    %13 = vsyncpa [#allocation3], 0
    %14 = vsyncpa [#allocation5], 0
    // Predicated region
    $region2: #{lstm_cell_wrapper_forward.1} parent=1 // pred_check
      _
    $region3: #{lstm_cell_wrapper_forward.1} parent=1 // pred_check_branch
      %16 = sbr.rel (0) target = $region5
    $region4: #{lstm_cell_wrapper_forward.1} parent=1 // pred_region
      _
    $region5: #{lstm_cell_wrapper_forward.1} parent=1 // pred_fallthru
      _
    // Predicated region
    $region6: #{lstm_cell_wrapper_forward.1} parent=1 // pred_check
      _
    $region7: #{lstm_cell_wrapper_forward.1} parent=1 // pred_check_branch
      %18 = sbr.rel (0) target = $region9
    $region8: #{lstm_cell_wrapper_forward.1} parent=1 // pred_region
      _
    $region9: #{lstm_cell_wrapper_forward.1} parent=1 // pred_fallthru
      _
    // Predicated region
    $region10: #{lstm_cell_wrapper_forward.1} parent=1 // pred_check
      _
    $region11: #{lstm_cell_wrapper_forward.1} parent=1 // pred_check_branch
      %20 = sbr.rel (0) target = $region13
    $region12: #{lstm_cell_wrapper_forward.1} parent=1 // pred_region
      _
    $region13: #{lstm_cell_wrapper_forward.1} parent=1 // pred_fallthru
      _
    // Predicated region
    $region14: #{lstm_cell_wrapper_forward.1} parent=1 // pred_check
      _
    $region15: #{lstm_cell_wrapper_forward.1} parent=1 // pred_check_branch
      %22 = sbr.rel (0) target = $region17
    $region16: #{lstm_cell_wrapper_forward.1} parent=1 // pred_region
      %s24 = ssub.s32 4096, 4096
      %25 = vsyncadd [#allocation3], %s24
      %s26 = sshll.u32 [#allocation2], 4
      %s27 = int_to_ptr.vmem [resolvable:$true] %s26
      %32 = dma.hbm_to_vmem [thread:$0]  %s3, 4096, %s27, [#allocation3], 64, 64, 4
    $region17: #{lstm_cell_wrapper_forward.1} parent=1 // pred_fallthru
      _
    // Predicated region
    $region18: #{lstm_cell_wrapper_forward.1} parent=1 // pred_check
      _
    $region19: #{lstm_cell_wrapper_forward.1} parent=1 // pred_check_branch
      %34 = sbr.rel (0) target = $region21
    $region20: #{lstm_cell_wrapper_forward.1} parent=1 // pred_region
      %s36 = ssub.s32 4096, 4096
      %37 = vsyncadd [#allocation5], %s36
      %s38 = sshll.u32 [#allocation4], 4
      %s39 = int_to_ptr.vmem [resolvable:$true] %s38
      %44 = dma.hbm_to_vmem [thread:$0]  %s4, 4096, %s39, [#allocation5], 64, 64, 4
    $region21: #{lstm_cell_wrapper_forward.1} parent=1 // pred_fallthru
      _
    // Predicated region
    $region22: #{lstm_cell_wrapper_forward.1} parent=1 // pred_check
      _
    $region23: #{lstm_cell_wrapper_forward.1} parent=1 // pred_check_branch
      %46 = sbr.rel (0) target = $region25
    $region24: #{lstm_cell_wrapper_forward.1} parent=1 // pred_region
      _
    $region25: #{lstm_cell_wrapper_forward.1} parent=1 // pred_fallthru
      _
    // Predicated region
    $region26: #{lstm_cell_wrapper_forward.1} parent=1 // pred_check
      _
    $region27: #{lstm_cell_wrapper_forward.1} parent=1 // pred_check_branch
      %48 = sbr.rel (0) target = $region29
    $region28: #{lstm_cell_wrapper_forward.1} parent=1 // pred_region
      %49 = dma.done [#allocation3], 4096
    $region29: #{lstm_cell_wrapper_forward.1} parent=1 // pred_fallthru
      _
    // Predicated region
    $region30: #{lstm_cell_wrapper_forward.1} parent=1 // pred_check
      _
    $region31: #{lstm_cell_wrapper_forward.1} parent=1 // pred_check_branch
      %51 = sbr.rel (0) target = $region33
    $region32: #{lstm_cell_wrapper_forward.1} parent=1 // pred_region
      %52 = dma.done [#allocation5], 4096
    $region33: #{lstm_cell_wrapper_forward.1} parent=1 // pred_fallthru
      _
    %v54 = vld [vmem:[%s0] sm:$0xf]
    %v55 = vld [vmem:[%s0 + $0x4] sm:$0xf]
    %v56 = vld [vmem:[%s1] sm:$0xf]
    %v57 = vld [vmem:[%s1 + $0x4] sm:$0xf]
    %v58 = vld [vmem:[#allocation2] sm:$0xf]
    %v59 = vld [vmem:[#allocation2 + $0x4] sm:$0xf]
    %v60 = vld [vmem:[#allocation2 + $0x8] sm:$0xf]
    %v61 = vld [vmem:[#allocation2 + $0xc] sm:$0xf]
    %v62 = vld [vmem:[#allocation2 + $0x10] sm:$0xf]
    %v63 = vld [vmem:[#allocation2 + $0x14] sm:$0xf]
    %v64 = vld [vmem:[#allocation2 + $0x18] sm:$0xf]
    %v65 = vld [vmem:[#allocation2 + $0x1c] sm:$0xf]
    %v66 = vld [vmem:[#allocation2 + $0x20] sm:$0xf]
    %v67 = vld [vmem:[#allocation2 + $0x24] sm:$0xf]
    %v68 = vld [vmem:[#allocation2 + $0x28] sm:$0xf]
    %v69 = vld [vmem:[#allocation2 + $0x2c] sm:$0xf]
    %v70 = vld [vmem:[#allocation2 + $0x30] sm:$0xf]
    %v71 = vld [vmem:[#allocation2 + $0x34] sm:$0xf]
    %v72 = vld [vmem:[#allocation2 + $0x38] sm:$0xf]
    %v73 = vld [vmem:[#allocation2 + $0x3c] sm:$0xf]
    %v74 = vld [vmem:[#allocation4] sm:$0xf]
    %v75 = vld [vmem:[#allocation4 + $0x4] sm:$0xf]
    %v76 = vld [vmem:[#allocation4 + $0x8] sm:$0xf]
    %v77 = vld [vmem:[#allocation4 + $0xc] sm:$0xf]
    %v78 = vld [vmem:[#allocation4 + $0x10] sm:$0xf]
    %v79 = vld [vmem:[#allocation4 + $0x14] sm:$0xf]
    %v80 = vld [vmem:[#allocation4 + $0x18] sm:$0xf]
    %v81 = vld [vmem:[#allocation4 + $0x1c] sm:$0xf]
    %v82 = vld [vmem:[#allocation4 + $0x20] sm:$0xf]
    %v83 = vld [vmem:[#allocation4 + $0x24] sm:$0xf]
    %v84 = vld [vmem:[#allocation4 + $0x28] sm:$0xf]
    %v85 = vld [vmem:[#allocation4 + $0x2c] sm:$0xf]
    %v86 = vld [vmem:[#allocation4 + $0x30] sm:$0xf]
    %v87 = vld [vmem:[#allocation4 + $0x34] sm:$0xf]
    %v88 = vld [vmem:[#allocation4 + $0x38] sm:$0xf]
    %v89 = vld [vmem:[#allocation4 + $0x3c] sm:$0xf]
    %v92 = vunpack.c.l.b16 %v56
    %v93 = vunpack.c.l.b16 %v57
    %v94 = vpack.c.b16 %v93, %v92
    %v112 = vunpack.c.l.b16 %v74
    %v113 = vunpack.c.l.b16 %v75
    %v114 = vunpack.c.l.b16 %v76
    %v115 = vunpack.c.l.b16 %v77
    %v116 = vunpack.c.l.b16 %v78
    %v117 = vunpack.c.l.b16 %v79
    %v118 = vunpack.c.l.b16 %v80
    %v119 = vunpack.c.l.b16 %v81
    %v120 = vunpack.c.l.b16 %v82
    %v121 = vunpack.c.l.b16 %v83
    %v122 = vunpack.c.l.b16 %v84
    %v123 = vunpack.c.l.b16 %v85
    %v124 = vunpack.c.l.b16 %v86
    %v125 = vunpack.c.l.b16 %v87
    %v126 = vunpack.c.l.b16 %v88
    %v127 = vunpack.c.l.b16 %v89
    %v128 = vpack.c.b16 %v113, %v112
    %v129 = vpack.c.b16 %v115, %v114
    %v130 = vpack.c.b16 %v117, %v116
    %v131 = vpack.c.b16 %v119, %v118
    %v132 = vpack.c.b16 %v121, %v120
    %v133 = vpack.c.b16 %v123, %v122
    %v134 = vpack.c.b16 %v125, %v124
    %v135 = vpack.c.b16 %v127, %v126
    %144 = vmatprep.subr.bf16.mxu0 0
    %145 = vmatpush1.bf16.msra.mxu0 %v128
    %146 = vmatprep.subr.bf16.mxu0 0
    %147 = vmatpush1.bf16.msra.mxu0 %v129
    %148 = vmatprep.subr.bf16.mxu0 0
    %149 = vmatpush1.bf16.msra.mxu0 %v130
    %150 = vmatprep.subr.bf16.mxu0 0
    %151 = vmatpush1.bf16.msra.mxu0 %v131
    %152 = vmatprep.subr.bf16.mxu0 0
    %153 = vmatpush1.bf16.msra.mxu0 %v132
    %154 = vmatprep.subr.bf16.mxu0 0
    %155 = vmatpush1.bf16.msra.mxu0 %v133
    %156 = vmatprep.subr.bf16.mxu0 0
    %157 = vmatpush1.bf16.msra.mxu0 %v134
    %158 = vmatprep.subr.bf16.mxu0 0
    %159 = vmatpush1.bf16.msra.mxu0 %v135
    %160 = vmatprep.subr.bf16.mxu0 0
    %161 = vmatpush1.bf16.msra.mxu0 0
    %162 = vmatprep.subr.bf16.mxu0 0
    %163 = vmatpush1.bf16.msra.mxu0 0
    %164 = vmatprep.subr.bf16.mxu0 0
    %165 = vmatpush1.bf16.msra.mxu0 0
    %166 = vmatprep.subr.bf16.mxu0 0
    %167 = vmatpush1.bf16.msra.mxu0 0
    %168 = vmatprep.subr.bf16.mxu0 0
    %169 = vmatpush1.bf16.msra.mxu0 0
    %170 = vmatprep.subr.bf16.mxu0 0
    %171 = vmatpush1.bf16.msra.mxu0 0
    %172 = vmatprep.subr.bf16.mxu0 0
    %173 = vmatpush1.bf16.msra.mxu0 0
    %174 = vmatprep.subr.bf16.mxu0 0
    %175 = vmatpush1.bf16.msra.mxu0 0
    %176 = vmatprep.mubr.bf16.mxu0 0
    %177 = vmatmul.mubr.bf16.gmra.mrb[0].mxu0 %v94
    %v178 = vpop.f32.mrb[0].mxu0
    %v179 = vadd.f32 0.0, %v178
    %v180 = vpop.f32.mrb[0].mxu0
    %v181 = vpop.f32.mrb[0].mxu0
    %v182 = vadd.f32 0.0, %v181
    %v183 = vpop.f32.mrb[0].mxu0
    %184 = vdwg.mxu0
    %v187 = vunpack.c.l.b16 %v54
    %v188 = vunpack.c.l.b16 %v55
    %v189 = vpack.c.b16 %v188, %v187
    %v207 = vunpack.c.l.b16 %v58
    %v208 = vunpack.c.l.b16 %v59
    %v209 = vunpack.c.l.b16 %v60
    %v210 = vunpack.c.l.b16 %v61
    %v211 = vunpack.c.l.b16 %v62
    %v212 = vunpack.c.l.b16 %v63
    %v213 = vunpack.c.l.b16 %v64
    %v214 = vunpack.c.l.b16 %v65
    %v215 = vunpack.c.l.b16 %v66
    %v216 = vunpack.c.l.b16 %v67
    %v217 = vunpack.c.l.b16 %v68
    %v218 = vunpack.c.l.b16 %v69
    %v219 = vunpack.c.l.b16 %v70
    %v220 = vunpack.c.l.b16 %v71
    %v221 = vunpack.c.l.b16 %v72
    %v222 = vunpack.c.l.b16 %v73
    %v223 = vpack.c.b16 %v208, %v207
    %v224 = vpack.c.b16 %v210, %v209
    %v225 = vpack.c.b16 %v212, %v211
    %v226 = vpack.c.b16 %v214, %v213
    %v227 = vpack.c.b16 %v216, %v215
    %v228 = vpack.c.b16 %v218, %v217
    %v229 = vpack.c.b16 %v220, %v219
    %v230 = vpack.c.b16 %v222, %v221
    %239 = vmatprep.subr.bf16.mxu0 0
    %240 = vmatpush1.bf16.msra.mxu0 %v223
    %241 = vmatprep.subr.bf16.mxu0 0
    %242 = vmatpush1.bf16.msra.mxu0 %v224
    %243 = vmatprep.subr.bf16.mxu0 0
    %244 = vmatpush1.bf16.msra.mxu0 %v225
    %245 = vmatprep.subr.bf16.mxu0 0
    %246 = vmatpush1.bf16.msra.mxu0 %v226
    %247 = vmatprep.subr.bf16.mxu0 0
    %248 = vmatpush1.bf16.msra.mxu0 %v227
    %249 = vmatprep.subr.bf16.mxu0 0
    %250 = vmatpush1.bf16.msra.mxu0 %v228
    %251 = vmatprep.subr.bf16.mxu0 0
    %252 = vmatpush1.bf16.msra.mxu0 %v229
    %253 = vmatprep.subr.bf16.mxu0 0
    %254 = vmatpush1.bf16.msra.mxu0 %v230
    %255 = vmatprep.subr.bf16.mxu0 0
    %256 = vmatpush1.bf16.msra.mxu0 0
    %257 = vmatprep.subr.bf16.mxu0 0
    %258 = vmatpush1.bf16.msra.mxu0 0
    %259 = vmatprep.subr.bf16.mxu0 0
    %260 = vmatpush1.bf16.msra.mxu0 0
    %261 = vmatprep.subr.bf16.mxu0 0
    %262 = vmatpush1.bf16.msra.mxu0 0
    %263 = vmatprep.subr.bf16.mxu0 0
    %264 = vmatpush1.bf16.msra.mxu0 0
    %265 = vmatprep.subr.bf16.mxu0 0
    %266 = vmatpush1.bf16.msra.mxu0 0
    %267 = vmatprep.subr.bf16.mxu0 0
    %268 = vmatpush1.bf16.msra.mxu0 0
    %269 = vmatprep.subr.bf16.mxu0 0
    %270 = vmatpush1.bf16.msra.mxu0 0
    %271 = vmatprep.mubr.bf16.mxu0 0
    %272 = vmatmul.mubr.bf16.gmra.mrb[0].mxu0 %v189
    %v273 = vpop.f32.mrb[0].mxu0
    %v274 = vadd.f32 %v179, %v273
    %v275 = vpop.f32.mrb[0].mxu0
    %v276 = vpop.f32.mrb[0].mxu0
    %v277 = vadd.f32 %v182, %v276
    %v278 = vpop.f32.mrb[0].mxu0
    %279 = vdwg.mxu0
    %v280 = vld [vmem:[%s5] sm:$0x1]
    %v282 = vlaneseq
    %v283 = vshrl.u32 %v282, 7
    %v284 = vsub.s32 0, %v283
    %v285 = vrot.slane %v280, %v284
    %v287 = vadd.f32 %v274, %v285
    %v288 = vadd.f32 %v277, %v285
    %v289 = vmul.f32 %v287, 0.5
    %v290 = vmul.f32 %v288, 0.5
    %v291 = vtanh.pop %v289
    %v292 = vtanh.pop %v290
    %v293 = vmul.f32 %v291, 0.5
    %v294 = vmul.f32 %v292, 0.5
    %v295 = vadd.f32 %v293, 0.5
    %v296 = vadd.f32 %v294, 0.5
    %s297 = scalar_lea.vmem [#allocation2], 64
    %v298 = vld [vmem:[%s297] sm:$0xf]
    %v299 = vld [vmem:[%s297 + $0x4] sm:$0xf]
    %v300 = vld [vmem:[%s297 + $0x8] sm:$0xf]
    %v301 = vld [vmem:[%s297 + $0xc] sm:$0xf]
    %v302 = vld [vmem:[%s297 + $0x10] sm:$0xf]
    %v303 = vld [vmem:[%s297 + $0x14] sm:$0xf]
    %v304 = vld [vmem:[%s297 + $0x18] sm:$0xf]
    %v305 = vld [vmem:[%s297 + $0x1c] sm:$0xf]
    %v306 = vld [vmem:[%s297 + $0x20] sm:$0xf]
    %v307 = vld [vmem:[%s297 + $0x24] sm:$0xf]
    %v308 = vld [vmem:[%s297 + $0x28] sm:$0xf]
    %v309 = vld [vmem:[%s297 + $0x2c] sm:$0xf]
    %v310 = vld [vmem:[%s297 + $0x30] sm:$0xf]
    %v311 = vld [vmem:[%s297 + $0x34] sm:$0xf]
    %v312 = vld [vmem:[%s297 + $0x38] sm:$0xf]
    %v313 = vld [vmem:[%s297 + $0x3c] sm:$0xf]
    %s314 = scalar_lea.vmem [#allocation4], 64
    %v315 = vld [vmem:[%s314] sm:$0xf]
    %v316 = vld [vmem:[%s314 + $0x4] sm:$0xf]
    %v317 = vld [vmem:[%s314 + $0x8] sm:$0xf]
    %v318 = vld [vmem:[%s314 + $0xc] sm:$0xf]
    %v319 = vld [vmem:[%s314 + $0x10] sm:$0xf]
    %v320 = vld [vmem:[%s314 + $0x14] sm:$0xf]
    %v321 = vld [vmem:[%s314 + $0x18] sm:$0xf]
    %v322 = vld [vmem:[%s314 + $0x1c] sm:$0xf]
    %v323 = vld [vmem:[%s314 + $0x20] sm:$0xf]
    %v324 = vld [vmem:[%s314 + $0x24] sm:$0xf]
    %v325 = vld [vmem:[%s314 + $0x28] sm:$0xf]
    %v326 = vld [vmem:[%s314 + $0x2c] sm:$0xf]
    %v327 = vld [vmem:[%s314 + $0x30] sm:$0xf]
    %v328 = vld [vmem:[%s314 + $0x34] sm:$0xf]
    %v329 = vld [vmem:[%s314 + $0x38] sm:$0xf]
    %v330 = vld [vmem:[%s314 + $0x3c] sm:$0xf]
    %v347 = vunpack.c.l.b16 %v315
    %v348 = vunpack.c.l.b16 %v316
    %v349 = vunpack.c.l.b16 %v317
    %v350 = vunpack.c.l.b16 %v318
    %v351 = vunpack.c.l.b16 %v319
    %v352 = vunpack.c.l.b16 %v320
    %v353 = vunpack.c.l.b16 %v321
    %v354 = vunpack.c.l.b16 %v322
    %v355 = vunpack.c.l.b16 %v323
    %v356 = vunpack.c.l.b16 %v324
    %v357 = vunpack.c.l.b16 %v325
    %v358 = vunpack.c.l.b16 %v326
    %v359 = vunpack.c.l.b16 %v327
    %v360 = vunpack.c.l.b16 %v328
    %v361 = vunpack.c.l.b16 %v329
    %v362 = vunpack.c.l.b16 %v330
    %v363 = vpack.c.b16 %v348, %v347
    %v364 = vpack.c.b16 %v350, %v349
    %v365 = vpack.c.b16 %v352, %v351
    %v366 = vpack.c.b16 %v354, %v353
    %v367 = vpack.c.b16 %v356, %v355
    %v368 = vpack.c.b16 %v358, %v357
    %v369 = vpack.c.b16 %v360, %v359
    %v370 = vpack.c.b16 %v362, %v361
    %379 = vmatprep.subr.bf16.mxu0 0
    %380 = vmatpush1.bf16.msra.mxu0 %v363
    %381 = vmatprep.subr.bf16.mxu0 0
    %382 = vmatpush1.bf16.msra.mxu0 %v364
    %383 = vmatprep.subr.bf16.mxu0 0
    %384 = vmatpush1.bf16.msra.mxu0 %v365
    %385 = vmatprep.subr.bf16.mxu0 0
    %386 = vmatpush1.bf16.msra.mxu0 %v366
    %387 = vmatprep.subr.bf16.mxu0 0
    %388 = vmatpush1.bf16.msra.mxu0 %v367
    %389 = vmatprep.subr.bf16.mxu0 0
    %390 = vmatpush1.bf16.msra.mxu0 %v368
    %391 = vmatprep.subr.bf16.mxu0 0
    %392 = vmatpush1.bf16.msra.mxu0 %v369
    %393 = vmatprep.subr.bf16.mxu0 0
    %394 = vmatpush1.bf16.msra.mxu0 %v370
    %395 = vmatprep.subr.bf16.mxu0 0
    %396 = vmatpush1.bf16.msra.mxu0 0
    %397 = vmatprep.subr.bf16.mxu0 0
    %398 = vmatpush1.bf16.msra.mxu0 0
    %399 = vmatprep.subr.bf16.mxu0 0
    %400 = vmatpush1.bf16.msra.mxu0 0
    %401 = vmatprep.subr.bf16.mxu0 0
    %402 = vmatpush1.bf16.msra.mxu0 0
    %403 = vmatprep.subr.bf16.mxu0 0
    %404 = vmatpush1.bf16.msra.mxu0 0
    %405 = vmatprep.subr.bf16.mxu0 0
    %406 = vmatpush1.bf16.msra.mxu0 0
    %407 = vmatprep.subr.bf16.mxu0 0
    %408 = vmatpush1.bf16.msra.mxu0 0
    %409 = vmatprep.subr.bf16.mxu0 0
    %410 = vmatpush1.bf16.msra.mxu0 0
    %411 = vmatprep.mubr.bf16.mxu0 0
    %412 = vmatmul.mubr.bf16.gmra.mrb[0].mxu0 %v94
    %v413 = vpop.f32.mrb[0].mxu0
    %v414 = vadd.f32 0.0, %v413
    %v415 = vpop.f32.mrb[0].mxu0
    %v416 = vpop.f32.mrb[0].mxu0
    %v417 = vadd.f32 0.0, %v416
    %v418 = vpop.f32.mrb[0].mxu0
    %419 = vdwg.mxu0
    %v436 = vunpack.c.l.b16 %v298
    %v437 = vunpack.c.l.b16 %v299
    %v438 = vunpack.c.l.b16 %v300
    %v439 = vunpack.c.l.b16 %v301
    %v440 = vunpack.c.l.b16 %v302
    %v441 = vunpack.c.l.b16 %v303
    %v442 = vunpack.c.l.b16 %v304
    %v443 = vunpack.c.l.b16 %v305
    %v444 = vunpack.c.l.b16 %v306
    %v445 = vunpack.c.l.b16 %v307
    %v446 = vunpack.c.l.b16 %v308
    %v447 = vunpack.c.l.b16 %v309
    %v448 = vunpack.c.l.b16 %v310
    %v449 = vunpack.c.l.b16 %v311
    %v450 = vunpack.c.l.b16 %v312
    %v451 = vunpack.c.l.b16 %v313
    %v452 = vpack.c.b16 %v437, %v436
    %v453 = vpack.c.b16 %v439, %v438
    %v454 = vpack.c.b16 %v441, %v440
    %v455 = vpack.c.b16 %v443, %v442
    %v456 = vpack.c.b16 %v445, %v444
    %v457 = vpack.c.b16 %v447, %v446
    %v458 = vpack.c.b16 %v449, %v448
    %v459 = vpack.c.b16 %v451, %v450
    %468 = vmatprep.subr.bf16.mxu0 0
    %469 = vmatpush1.bf16.msra.mxu0 %v452
    %470 = vmatprep.subr.bf16.mxu0 0
    %471 = vmatpush1.bf16.msra.mxu0 %v453
    %472 = vmatprep.subr.bf16.mxu0 0
    %473 = vmatpush1.bf16.msra.mxu0 %v454
    %474 = vmatprep.subr.bf16.mxu0 0
    %475 = vmatpush1.bf16.msra.mxu0 %v455
    %476 = vmatprep.subr.bf16.mxu0 0
    %477 = vmatpush1.bf16.msra.mxu0 %v456
    %478 = vmatprep.subr.bf16.mxu0 0
    %479 = vmatpush1.bf16.msra.mxu0 %v457
    %480 = vmatprep.subr.bf16.mxu0 0
    %481 = vmatpush1.bf16.msra.mxu0 %v458
    %482 = vmatprep.subr.bf16.mxu0 0
    %483 = vmatpush1.bf16.msra.mxu0 %v459
    %484 = vmatprep.subr.bf16.mxu0 0
    %485 = vmatpush1.bf16.msra.mxu0 0
    %486 = vmatprep.subr.bf16.mxu0 0
    %487 = vmatpush1.bf16.msra.mxu0 0
    %488 = vmatprep.subr.bf16.mxu0 0
    %489 = vmatpush1.bf16.msra.mxu0 0
    %490 = vmatprep.subr.bf16.mxu0 0
    %491 = vmatpush1.bf16.msra.mxu0 0
    %492 = vmatprep.subr.bf16.mxu0 0
    %493 = vmatpush1.bf16.msra.mxu0 0
    %494 = vmatprep.subr.bf16.mxu0 0
    %495 = vmatpush1.bf16.msra.mxu0 0
    %496 = vmatprep.subr.bf16.mxu0 0
    %497 = vmatpush1.bf16.msra.mxu0 0
    %498 = vmatprep.subr.bf16.mxu0 0
    %499 = vmatpush1.bf16.msra.mxu0 0
    %500 = vmatprep.mubr.bf16.mxu0 0
    %501 = vmatmul.mubr.bf16.gmra.mrb[0].mxu0 %v189
    %v502 = vpop.f32.mrb[0].mxu0
    %v503 = vadd.f32 %v414, %v502
    %v504 = vpop.f32.mrb[0].mxu0
    %v505 = vpop.f32.mrb[0].mxu0
    %v506 = vadd.f32 %v417, %v505
    %v507 = vpop.f32.mrb[0].mxu0
    %508 = vdwg.mxu0
    %s509 = scalar_lea.vmem %s5, 1
    %v510 = vld [vmem:[%s509] sm:$0x1]
    %v512 = vlaneseq
    %v513 = vshrl.u32 %v512, 7
    %v514 = vsub.s32 0, %v513
    %v515 = vrot.slane %v510, %v514
    %v517 = vadd.f32 %v503, %v515
    %v518 = vadd.f32 %v506, %v515
    %v519 = vmul.f32 %v517, 0.5
    %v520 = vmul.f32 %v518, 0.5
    %v521 = vtanh.pop %v519
    %v522 = vtanh.pop %v520
    %v523 = vmul.f32 %v521, 0.5
    %v524 = vmul.f32 %v522, 0.5
    %v525 = vadd.f32 %v523, 0.5
    %v526 = vadd.f32 %v524, 0.5
    %s527 = scalar_lea.vmem [#allocation2], 128
    %v528 = vld [vmem:[%s527] sm:$0xf]
    %v529 = vld [vmem:[%s527 + $0x4] sm:$0xf]
    %v530 = vld [vmem:[%s527 + $0x8] sm:$0xf]
    %v531 = vld [vmem:[%s527 + $0xc] sm:$0xf]
    %v532 = vld [vmem:[%s527 + $0x10] sm:$0xf]
    %v533 = vld [vmem:[%s527 + $0x14] sm:$0xf]
    %v534 = vld [vmem:[%s527 + $0x18] sm:$0xf]
    %v535 = vld [vmem:[%s527 + $0x1c] sm:$0xf]
    %v536 = vld [vmem:[%s527 + $0x20] sm:$0xf]
    %v537 = vld [vmem:[%s527 + $0x24] sm:$0xf]
    %v538 = vld [vmem:[%s527 + $0x28] sm:$0xf]
    %v539 = vld [vmem:[%s527 + $0x2c] sm:$0xf]
    %v540 = vld [vmem:[%s527 + $0x30] sm:$0xf]
    %v541 = vld [vmem:[%s527 + $0x34] sm:$0xf]
    %v542 = vld [vmem:[%s527 + $0x38] sm:$0xf]
    %v543 = vld [vmem:[%s527 + $0x3c] sm:$0xf]
    %s544 = scalar_lea.vmem [#allocation4], 128
    %v545 = vld [vmem:[%s544] sm:$0xf]
    %v546 = vld [vmem:[%s544 + $0x4] sm:$0xf]
    %v547 = vld [vmem:[%s544 + $0x8] sm:$0xf]
    %v548 = vld [vmem:[%s544 + $0xc] sm:$0xf]
    %v549 = vld [vmem:[%s544 + $0x10] sm:$0xf]
    %v550 = vld [vmem:[%s544 + $0x14] sm:$0xf]
    %v551 = vld [vmem:[%s544 + $0x18] sm:$0xf]
    %v552 = vld [vmem:[%s544 + $0x1c] sm:$0xf]
    %v553 = vld [vmem:[%s544 + $0x20] sm:$0xf]
    %v554 = vld [vmem:[%s544 + $0x24] sm:$0xf]
    %v555 = vld [vmem:[%s544 + $0x28] sm:$0xf]
    %v556 = vld [vmem:[%s544 + $0x2c] sm:$0xf]
    %v557 = vld [vmem:[%s544 + $0x30] sm:$0xf]
    %v558 = vld [vmem:[%s544 + $0x34] sm:$0xf]
    %v559 = vld [vmem:[%s544 + $0x38] sm:$0xf]
    %v560 = vld [vmem:[%s544 + $0x3c] sm:$0xf]
    %v577 = vunpack.c.l.b16 %v545
    %v578 = vunpack.c.l.b16 %v546
    %v579 = vunpack.c.l.b16 %v547
    %v580 = vunpack.c.l.b16 %v548
    %v581 = vunpack.c.l.b16 %v549
    %v582 = vunpack.c.l.b16 %v550
    %v583 = vunpack.c.l.b16 %v551
    %v584 = vunpack.c.l.b16 %v552
    %v585 = vunpack.c.l.b16 %v553
    %v586 = vunpack.c.l.b16 %v554
    %v587 = vunpack.c.l.b16 %v555
    %v588 = vunpack.c.l.b16 %v556
    %v589 = vunpack.c.l.b16 %v557
    %v590 = vunpack.c.l.b16 %v558
    %v591 = vunpack.c.l.b16 %v559
    %v592 = vunpack.c.l.b16 %v560
    %v593 = vpack.c.b16 %v578, %v577
    %v594 = vpack.c.b16 %v580, %v579
    %v595 = vpack.c.b16 %v582, %v581
    %v596 = vpack.c.b16 %v584, %v583
    %v597 = vpack.c.b16 %v586, %v585
    %v598 = vpack.c.b16 %v588, %v587
    %v599 = vpack.c.b16 %v590, %v589
    %v600 = vpack.c.b16 %v592, %v591
    %609 = vmatprep.subr.bf16.mxu0 0
    %610 = vmatpush1.bf16.msra.mxu0 %v593
    %611 = vmatprep.subr.bf16.mxu0 0
    %612 = vmatpush1.bf16.msra.mxu0 %v594
    %613 = vmatprep.subr.bf16.mxu0 0
    %614 = vmatpush1.bf16.msra.mxu0 %v595
    %615 = vmatprep.subr.bf16.mxu0 0
    %616 = vmatpush1.bf16.msra.mxu0 %v596
    %617 = vmatprep.subr.bf16.mxu0 0
    %618 = vmatpush1.bf16.msra.mxu0 %v597
    %619 = vmatprep.subr.bf16.mxu0 0
    %620 = vmatpush1.bf16.msra.mxu0 %v598
    %621 = vmatprep.subr.bf16.mxu0 0
    %622 = vmatpush1.bf16.msra.mxu0 %v599
    %623 = vmatprep.subr.bf16.mxu0 0
    %624 = vmatpush1.bf16.msra.mxu0 %v600
    %625 = vmatprep.subr.bf16.mxu0 0
    %626 = vmatpush1.bf16.msra.mxu0 0
    %627 = vmatprep.subr.bf16.mxu0 0
    %628 = vmatpush1.bf16.msra.mxu0 0
    %629 = vmatprep.subr.bf16.mxu0 0
    %630 = vmatpush1.bf16.msra.mxu0 0
    %631 = vmatprep.subr.bf16.mxu0 0
    %632 = vmatpush1.bf16.msra.mxu0 0
    %633 = vmatprep.subr.bf16.mxu0 0
    %634 = vmatpush1.bf16.msra.mxu0 0
    %635 = vmatprep.subr.bf16.mxu0 0
    %636 = vmatpush1.bf16.msra.mxu0 0
    %637 = vmatprep.subr.bf16.mxu0 0
    %638 = vmatpush1.bf16.msra.mxu0 0
    %639 = vmatprep.subr.bf16.mxu0 0
    %640 = vmatpush1.bf16.msra.mxu0 0
    %641 = vmatprep.mubr.bf16.mxu0 0
    %642 = vmatmul.mubr.bf16.gmra.mrb[0].mxu0 %v94
    %v643 = vpop.f32.mrb[0].mxu0
    %v644 = vadd.f32 0.0, %v643
    %v645 = vpop.f32.mrb[0].mxu0
    %v646 = vpop.f32.mrb[0].mxu0
    %v647 = vadd.f32 0.0, %v646
    %v648 = vpop.f32.mrb[0].mxu0
    %649 = vdwg.mxu0
    %v666 = vunpack.c.l.b16 %v528
    %v667 = vunpack.c.l.b16 %v529
    %v668 = vunpack.c.l.b16 %v530
    %v669 = vunpack.c.l.b16 %v531
    %v670 = vunpack.c.l.b16 %v532
    %v671 = vunpack.c.l.b16 %v533
    %v672 = vunpack.c.l.b16 %v534
    %v673 = vunpack.c.l.b16 %v535
    %v674 = vunpack.c.l.b16 %v536
    %v675 = vunpack.c.l.b16 %v537
    %v676 = vunpack.c.l.b16 %v538
    %v677 = vunpack.c.l.b16 %v539
    %v678 = vunpack.c.l.b16 %v540
    %v679 = vunpack.c.l.b16 %v541
    %v680 = vunpack.c.l.b16 %v542
    %v681 = vunpack.c.l.b16 %v543
    %v682 = vpack.c.b16 %v667, %v666
    %v683 = vpack.c.b16 %v669, %v668
    %v684 = vpack.c.b16 %v671, %v670
    %v685 = vpack.c.b16 %v673, %v672
    %v686 = vpack.c.b16 %v675, %v674
    %v687 = vpack.c.b16 %v677, %v676
    %v688 = vpack.c.b16 %v679, %v678
    %v689 = vpack.c.b16 %v681, %v680
    %698 = vmatprep.subr.bf16.mxu0 0
    %699 = vmatpush1.bf16.msra.mxu0 %v682
    %700 = vmatprep.subr.bf16.mxu0 0
    %701 = vmatpush1.bf16.msra.mxu0 %v683
    %702 = vmatprep.subr.bf16.mxu0 0
    %703 = vmatpush1.bf16.msra.mxu0 %v684
    %704 = vmatprep.subr.bf16.mxu0 0
    %705 = vmatpush1.bf16.msra.mxu0 %v685
    %706 = vmatprep.subr.bf16.mxu0 0
    %707 = vmatpush1.bf16.msra.mxu0 %v686
    %708 = vmatprep.subr.bf16.mxu0 0
    %709 = vmatpush1.bf16.msra.mxu0 %v687
    %710 = vmatprep.subr.bf16.mxu0 0
    %711 = vmatpush1.bf16.msra.mxu0 %v688
    %712 = vmatprep.subr.bf16.mxu0 0
    %713 = vmatpush1.bf16.msra.mxu0 %v689
    %714 = vmatprep.subr.bf16.mxu0 0
    %715 = vmatpush1.bf16.msra.mxu0 0
    %716 = vmatprep.subr.bf16.mxu0 0
    %717 = vmatpush1.bf16.msra.mxu0 0
    %718 = vmatprep.subr.bf16.mxu0 0
    %719 = vmatpush1.bf16.msra.mxu0 0
    %720 = vmatprep.subr.bf16.mxu0 0
    %721 = vmatpush1.bf16.msra.mxu0 0
    %722 = vmatprep.subr.bf16.mxu0 0
    %723 = vmatpush1.bf16.msra.mxu0 0
    %724 = vmatprep.subr.bf16.mxu0 0
    %725 = vmatpush1.bf16.msra.mxu0 0
    %726 = vmatprep.subr.bf16.mxu0 0
    %727 = vmatpush1.bf16.msra.mxu0 0
    %728 = vmatprep.subr.bf16.mxu0 0
    %729 = vmatpush1.bf16.msra.mxu0 0
    %730 = vmatprep.mubr.bf16.mxu0 0
    %731 = vmatmul.mubr.bf16.gmra.mrb[0].mxu0 %v189
    %v732 = vpop.f32.mrb[0].mxu0
    %v733 = vadd.f32 %v644, %v732
    %v734 = vpop.f32.mrb[0].mxu0
    %v735 = vpop.f32.mrb[0].mxu0
    %v736 = vadd.f32 %v647, %v735
    %v737 = vpop.f32.mrb[0].mxu0
    %738 = vdwg.mxu0
    %s739 = scalar_lea.vmem %s5, 2
    %v740 = vld [vmem:[%s739] sm:$0x1]
    %v742 = vlaneseq
    %v743 = vshrl.u32 %v742, 7
    %v744 = vsub.s32 0, %v743
    %v745 = vrot.slane %v740, %v744
    %v747 = vadd.f32 %v733, %v745
    %v748 = vadd.f32 %v736, %v745
    %v749 = vtanh.pop %v747
    %v750 = vtanh.pop %v748
    %s751 = scalar_lea.vmem [#allocation2], 192
    %v752 = vld [vmem:[%s751] sm:$0xf]
    %v753 = vld [vmem:[%s751 + $0x4] sm:$0xf]
    %v754 = vld [vmem:[%s751 + $0x8] sm:$0xf]
    %v755 = vld [vmem:[%s751 + $0xc] sm:$0xf]
    %v756 = vld [vmem:[%s751 + $0x10] sm:$0xf]
    %v757 = vld [vmem:[%s751 + $0x14] sm:$0xf]
    %v758 = vld [vmem:[%s751 + $0x18] sm:$0xf]
    %v759 = vld [vmem:[%s751 + $0x1c] sm:$0xf]
    %v760 = vld [vmem:[%s751 + $0x20] sm:$0xf]
    %v761 = vld [vmem:[%s751 + $0x24] sm:$0xf]
    %v762 = vld [vmem:[%s751 + $0x28] sm:$0xf]
    %v763 = vld [vmem:[%s751 + $0x2c] sm:$0xf]
    %v764 = vld [vmem:[%s751 + $0x30] sm:$0xf]
    %v765 = vld [vmem:[%s751 + $0x34] sm:$0xf]
    %v766 = vld [vmem:[%s751 + $0x38] sm:$0xf]
    %v767 = vld [vmem:[%s751 + $0x3c] sm:$0xf]
    %s768 = scalar_lea.vmem [#allocation4], 192
    %v769 = vld [vmem:[%s768] sm:$0xf]
    %v770 = vld [vmem:[%s768 + $0x4] sm:$0xf]
    %v771 = vld [vmem:[%s768 + $0x8] sm:$0xf]
    %v772 = vld [vmem:[%s768 + $0xc] sm:$0xf]
    %v773 = vld [vmem:[%s768 + $0x10] sm:$0xf]
    %v774 = vld [vmem:[%s768 + $0x14] sm:$0xf]
    %v775 = vld [vmem:[%s768 + $0x18] sm:$0xf]
    %v776 = vld [vmem:[%s768 + $0x1c] sm:$0xf]
    %v777 = vld [vmem:[%s768 + $0x20] sm:$0xf]
    %v778 = vld [vmem:[%s768 + $0x24] sm:$0xf]
    %v779 = vld [vmem:[%s768 + $0x28] sm:$0xf]
    %v780 = vld [vmem:[%s768 + $0x2c] sm:$0xf]
    %v781 = vld [vmem:[%s768 + $0x30] sm:$0xf]
    %v782 = vld [vmem:[%s768 + $0x34] sm:$0xf]
    %v783 = vld [vmem:[%s768 + $0x38] sm:$0xf]
    %v784 = vld [vmem:[%s768 + $0x3c] sm:$0xf]
    %v801 = vunpack.c.l.b16 %v769
    %v802 = vunpack.c.l.b16 %v770
    %v803 = vunpack.c.l.b16 %v771
    %v804 = vunpack.c.l.b16 %v772
    %v805 = vunpack.c.l.b16 %v773
    %v806 = vunpack.c.l.b16 %v774
    %v807 = vunpack.c.l.b16 %v775
    %v808 = vunpack.c.l.b16 %v776
    %v809 = vunpack.c.l.b16 %v777
    %v810 = vunpack.c.l.b16 %v778
    %v811 = vunpack.c.l.b16 %v779
    %v812 = vunpack.c.l.b16 %v780
    %v813 = vunpack.c.l.b16 %v781
    %v814 = vunpack.c.l.b16 %v782
    %v815 = vunpack.c.l.b16 %v783
    %v816 = vunpack.c.l.b16 %v784
    %v817 = vpack.c.b16 %v802, %v801
    %v818 = vpack.c.b16 %v804, %v803
    %v819 = vpack.c.b16 %v806, %v805
    %v820 = vpack.c.b16 %v808, %v807
    %v821 = vpack.c.b16 %v810, %v809
    %v822 = vpack.c.b16 %v812, %v811
    %v823 = vpack.c.b16 %v814, %v813
    %v824 = vpack.c.b16 %v816, %v815
    %833 = vmatprep.subr.bf16.mxu0 0
    %834 = vmatpush1.bf16.msra.mxu0 %v817
    %835 = vmatprep.subr.bf16.mxu0 0
    %836 = vmatpush1.bf16.msra.mxu0 %v818
    %837 = vmatprep.subr.bf16.mxu0 0
    %838 = vmatpush1.bf16.msra.mxu0 %v819
    %839 = vmatprep.subr.bf16.mxu0 0
    %840 = vmatpush1.bf16.msra.mxu0 %v820
    %841 = vmatprep.subr.bf16.mxu0 0
    %842 = vmatpush1.bf16.msra.mxu0 %v821
    %843 = vmatprep.subr.bf16.mxu0 0
    %844 = vmatpush1.bf16.msra.mxu0 %v822
    %845 = vmatprep.subr.bf16.mxu0 0
    %846 = vmatpush1.bf16.msra.mxu0 %v823
    %847 = vmatprep.subr.bf16.mxu0 0
    %848 = vmatpush1.bf16.msra.mxu0 %v824
    %849 = vmatprep.subr.bf16.mxu0 0
    %850 = vmatpush1.bf16.msra.mxu0 0
    %851 = vmatprep.subr.bf16.mxu0 0
    %852 = vmatpush1.bf16.msra.mxu0 0
    %853 = vmatprep.subr.bf16.mxu0 0
    %854 = vmatpush1.bf16.msra.mxu0 0
    %855 = vmatprep.subr.bf16.mxu0 0
    %856 = vmatpush1.bf16.msra.mxu0 0
    %857 = vmatprep.subr.bf16.mxu0 0
    %858 = vmatpush1.bf16.msra.mxu0 0
    %859 = vmatprep.subr.bf16.mxu0 0
    %860 = vmatpush1.bf16.msra.mxu0 0
    %861 = vmatprep.subr.bf16.mxu0 0
    %862 = vmatpush1.bf16.msra.mxu0 0
    %863 = vmatprep.subr.bf16.mxu0 0
    %864 = vmatpush1.bf16.msra.mxu0 0
    %865 = vmatprep.mubr.bf16.mxu0 0
    %866 = vmatmul.mubr.bf16.gmra.mrb[0].mxu0 %v94
    %v867 = vpop.f32.mrb[0].mxu0
    %v868 = vadd.f32 0.0, %v867
    %v869 = vpop.f32.mrb[0].mxu0
    %v870 = vpop.f32.mrb[0].mxu0
    %v871 = vadd.f32 0.0, %v870
    %v872 = vpop.f32.mrb[0].mxu0
    %873 = vdwg.mxu0
    %v890 = vunpack.c.l.b16 %v752
    %v891 = vunpack.c.l.b16 %v753
    %v892 = vunpack.c.l.b16 %v754
    %v893 = vunpack.c.l.b16 %v755
    %v894 = vunpack.c.l.b16 %v756
    %v895 = vunpack.c.l.b16 %v757
    %v896 = vunpack.c.l.b16 %v758
    %v897 = vunpack.c.l.b16 %v759
    %v898 = vunpack.c.l.b16 %v760
    %v899 = vunpack.c.l.b16 %v761
    %v900 = vunpack.c.l.b16 %v762
    %v901 = vunpack.c.l.b16 %v763
    %v902 = vunpack.c.l.b16 %v764
    %v903 = vunpack.c.l.b16 %v765
    %v904 = vunpack.c.l.b16 %v766
    %v905 = vunpack.c.l.b16 %v767
    %v906 = vpack.c.b16 %v891, %v890
    %v907 = vpack.c.b16 %v893, %v892
    %v908 = vpack.c.b16 %v895, %v894
    %v909 = vpack.c.b16 %v897, %v896
    %v910 = vpack.c.b16 %v899, %v898
    %v911 = vpack.c.b16 %v901, %v900
    %v912 = vpack.c.b16 %v903, %v902
    %v913 = vpack.c.b16 %v905, %v904
    %922 = vmatprep.subr.bf16.mxu0 0
    %923 = vmatpush1.bf16.msra.mxu0 %v906
    %924 = vmatprep.subr.bf16.mxu0 0
    %925 = vmatpush1.bf16.msra.mxu0 %v907
    %926 = vmatprep.subr.bf16.mxu0 0
    %927 = vmatpush1.bf16.msra.mxu0 %v908
    %928 = vmatprep.subr.bf16.mxu0 0
    %929 = vmatpush1.bf16.msra.mxu0 %v909
    %930 = vmatprep.subr.bf16.mxu0 0
    %931 = vmatpush1.bf16.msra.mxu0 %v910
    %932 = vmatprep.subr.bf16.mxu0 0
    %933 = vmatpush1.bf16.msra.mxu0 %v911
    %934 = vmatprep.subr.bf16.mxu0 0
    %935 = vmatpush1.bf16.msra.mxu0 %v912
    %936 = vmatprep.subr.bf16.mxu0 0
    %937 = vmatpush1.bf16.msra.mxu0 %v913
    %938 = vmatprep.subr.bf16.mxu0 0
    %939 = vmatpush1.bf16.msra.mxu0 0
    %940 = vmatprep.subr.bf16.mxu0 0
    %941 = vmatpush1.bf16.msra.mxu0 0
    %942 = vmatprep.subr.bf16.mxu0 0
    %943 = vmatpush1.bf16.msra.mxu0 0
    %944 = vmatprep.subr.bf16.mxu0 0
    %945 = vmatpush1.bf16.msra.mxu0 0
    %946 = vmatprep.subr.bf16.mxu0 0
    %947 = vmatpush1.bf16.msra.mxu0 0
    %948 = vmatprep.subr.bf16.mxu0 0
    %949 = vmatpush1.bf16.msra.mxu0 0
    %950 = vmatprep.subr.bf16.mxu0 0
    %951 = vmatpush1.bf16.msra.mxu0 0
    %952 = vmatprep.subr.bf16.mxu0 0
    %953 = vmatpush1.bf16.msra.mxu0 0
    %954 = vmatprep.mubr.bf16.mxu0 0
    %955 = vmatmul.mubr.bf16.gmra.mrb[0].mxu0 %v189
    %v956 = vpop.f32.mrb[0].mxu0
    %v957 = vadd.f32 %v868, %v956
    %v958 = vpop.f32.mrb[0].mxu0
    %v959 = vpop.f32.mrb[0].mxu0
    %v960 = vadd.f32 %v871, %v959
    %v961 = vpop.f32.mrb[0].mxu0
    %962 = vdwg.mxu0
    %s963 = scalar_lea.vmem %s5, 3
    %v964 = vld [vmem:[%s963] sm:$0x1]
    %v966 = vlaneseq
    %v967 = vshrl.u32 %v966, 7
    %v968 = vsub.s32 0, %v967
    %v969 = vrot.slane %v964, %v968
    %v971 = vadd.f32 %v957, %v969
    %v972 = vadd.f32 %v960, %v969
    %v973 = vmul.f32 %v971, 0.5
    %v974 = vmul.f32 %v972, 0.5
    %v975 = vtanh.pop %v973
    %v976 = vtanh.pop %v974
    %v977 = vmul.f32 %v975, 0.5
    %v978 = vmul.f32 %v976, 0.5
    %v979 = vadd.f32 %v977, 0.5
    %v980 = vadd.f32 %v978, 0.5
    %v981 = vld [vmem:[%s2] sm:$0xff]
    %v982 = vld [vmem:[%s2 + $0x8] sm:$0xff]
    %v983 = vmul.f32 %v525, %v981
    %v984 = vmul.f32 %v526, %v982
    %v985 = vmul.f32 %v295, %v749
    %v986 = vmul.f32 %v296, %v750
    %v987 = vadd.f32 %v983, %v985
    %v988 = vadd.f32 %v984, %v986
    %v989 = vtanh.pop %v987
    %v990 = vtanh.pop %v988
    %v991 = vmul.f32 %v979, %v989
    %v992 = vmul.f32 %v980, %v990
    %993 = vst [vmem:[%s6] sm:$0xff] %v991
    %994 = vst [vmem:[%s6 + $0x8] sm:$0xff] %v992
    %995 = vst [vmem:[%s7] sm:$0xff] %v987
    %996 = vst [vmem:[%s7 + $0x8] sm:$0xff] %v988
    // Predicated region
    $region34: #{lstm_cell_wrapper_forward.1} parent=1 // pred_check
      _
    $region35: #{lstm_cell_wrapper_forward.1} parent=1 // pred_check_branch
      %998 = sbr.rel (0) target = $region37
    $region36: #{lstm_cell_wrapper_forward.1} parent=1 // pred_region
      _
    $region37: #{lstm_cell_wrapper_forward.1} parent=1 // pred_fallthru
      _
    // Predicated region
    $region38: #{lstm_cell_wrapper_forward.1} parent=1 // pred_check
      _
    $region39: #{lstm_cell_wrapper_forward.1} parent=1 // pred_check_branch
      %1000 = sbr.rel (0) target = $region41
    $region40: #{lstm_cell_wrapper_forward.1} parent=1 // pred_region
      _
    $region41: #{lstm_cell_wrapper_forward.1} parent=1 // pred_fallthru
      _
    // Predicated region
    $region42: #{lstm_cell_wrapper_forward.1} parent=1 // pred_check
      _
    $region43: #{lstm_cell_wrapper_forward.1} parent=1 // pred_check_branch
      %1002 = sbr.rel (0) target = $region45
    $region44: #{lstm_cell_wrapper_forward.1} parent=1 // pred_region
      _
    $region45: #{lstm_cell_wrapper_forward.1} parent=1 // pred_fallthru
      _
    // Predicated region
    $region46: #{lstm_cell_wrapper_forward.1} parent=1 // pred_check
      _
    $region47: #{lstm_cell_wrapper_forward.1} parent=1 // pred_check_branch
      %1004 = sbr.rel (0) target = $region49
    $region48: #{lstm_cell_wrapper_forward.1} parent=1 // pred_region
      _
    $region49: #{lstm_cell_wrapper_forward.1} parent=1 // pred_fallthru
      _
    %1005 = vsyncpa [#allocation3], 1
    %1006 = vsyncpa [#allocation5], 1

</llo_original>
